<compile_context>
chip_gen: v7x
topology: tpu7x:2x2x1
jax: 0.10.0
libtpu: 0.0.40
codegen_flags: <defaults>
</compile_context>

<pallas_src>
import jax
import jax.numpy as jnp
from jax.experimental import pallas as pl
from jax.experimental.pallas import tpu as pltpu


def _round_up(x, m):
    return ((x + m - 1) // m) * m


_VMEM_LIMIT_BYTES = 48 * 1024 * 1024   # fits v7x 64 MiB physical w/ headroom


# --------------------------------------------------------------------------
# Kernel 1: fused feature transform for all three branches, K-tiled over c_in
#   acc += x_tile @ [W_low | W_high | W_mlp]   (bf16 MXU operands, f32 acc)
#   epilogue: split into H_low, H_high, relu(H_mlp)
# --------------------------------------------------------------------------
def _transform_kernel(x_ref, w_ref, h_low_ref, h_high_ref, o_mlp_ref, acc_ref):
    k = pl.program_id(1)

    @pl.when(k == 0)
    def _():
        acc_ref[...] = jnp.zeros_like(acc_ref)

    acc_ref[...] += jnp.dot(x_ref[...], w_ref[...],
                            preferred_element_type=jnp.float32)

    @pl.when(k == pl.num_programs(1) - 1)
    def _():
        c = h_low_ref.shape[-1]
        acc = acc_ref[...]
        h_low_ref[...] = acc[:, :c].astype(h_low_ref.dtype)
        h_high_ref[...] = acc[:, c:2 * c].astype(h_high_ref.dtype)
        o_mlp_ref[...] = jnp.maximum(acc[:, 2 * c:], 0.0).astype(o_mlp_ref.dtype)


# --------------------------------------------------------------------------
# attention3 + weighted mixture (f32 elementwise math)
# --------------------------------------------------------------------------
def _attention_mix(o_low, o_high, o_mlp, av, attv_ref):
    # av: [3, c_pad] attention vectors (padded cols are zero)
    s_l = jnp.sum(o_low * av[0:1, :], axis=-1, keepdims=True)    # [T,1]
    s_h = jnp.sum(o_high * av[1:2, :], axis=-1, keepdims=True)
    s_m = jnp.sum(o_mlp * av[2:3, :], axis=-1, keepdims=True)

    sig_l = jax.nn.sigmoid(s_l)
    sig_h = jax.nn.sigmoid(s_h)
    sig_m = jax.nn.sigmoid(s_m)

    inv_t = 1.0 / 3.0    # T = 3 in attention3
    # logits[:, j] = (sig . att_vec[:, j]) / T, att_vec read as SMEM scalars
    logits = [
        (sig_l * attv_ref[0, j]
         + sig_h * attv_ref[1, j]
         + sig_m * attv_ref[2, j]) * inv_t
        for j in range(3)
    ]
    m = jnp.maximum(jnp.maximum(logits[0], logits[1]), logits[2])
    e0 = jnp.exp(logits[0] - m)
    e1 = jnp.exp(logits[1] - m)
    e2 = jnp.exp(logits[2] - m)
    inv_den = pl.reciprocal(e0 + e1 + e2, approx=True)   # EUP slot, ~free

    return 3.0 * ((e0 * inv_den) * o_low
                  + (e1 * inv_den) * o_high
                  + (e2 * inv_den) * o_mlp)


# --------------------------------------------------------------------------
# Kernel 2 (fast path, adj_high == I - adj_low): stream only adj_low,
# accumulate both aggregations, epilogue does ReLU + attention + mix.
# --------------------------------------------------------------------------
def _mix_kernel_idhigh(adj_low_ref, h_low_ref, h_high_ref, h_high_row_ref,
                       o_mlp_ref, av_ref, attv_ref, o_ref,
                       acc_low, acc_high):
    k = pl.program_id(1)

    @pl.when(k == 0)
    def _():
        acc_low[...] = jnp.zeros_like(acc_low)
        acc_high[...] = jnp.zeros_like(acc_high)

    a = adj_low_ref[...]
    acc_low[...] += jnp.dot(a, h_low_ref[...], preferred_element_type=jnp.float32)
    acc_high[...] += jnp.dot(a, h_high_ref[...], preferred_element_type=jnp.float32)

    @pl.when(k == pl.num_programs(1) - 1)
    def _():
        o_low = jnp.maximum(acc_low[...], 0.0)
        # adj_high = I - adj_low  =>  adj_high @ H_high = H_high - adj_low @ H_high
        o_high = jnp.maximum(
            h_high_row_ref[...].astype(jnp.float32) - acc_high[...], 0.0)
        o_mlp = o_mlp_ref[...].astype(jnp.float32)
        out = _attention_mix(o_low, o_high, o_mlp, av_ref[...], attv_ref)
        o_ref[...] = out.astype(o_ref.dtype)


# --------------------------------------------------------------------------
# Kernel 2 (generic path): stream both adjacencies.
# --------------------------------------------------------------------------
def _mix_kernel_generic(adj_low_ref, adj_high_ref, h_low_ref, h_high_ref,
                        o_mlp_ref, av_ref, attv_ref, o_ref,
                        acc_low, acc_high):
    k = pl.program_id(1)

    @pl.when(k == 0)
    def _():
        acc_low[...] = jnp.zeros_like(acc_low)
        acc_high[...] = jnp.zeros_like(acc_high)

    acc_low[...] += jnp.dot(adj_low_ref[...], h_low_ref[...],
                            preferred_element_type=jnp.float32)
    acc_high[...] += jnp.dot(adj_high_ref[...], h_high_ref[...],
                             preferred_element_type=jnp.float32)

    @pl.when(k == pl.num_programs(1) - 1)
    def _():
        o_low = jnp.maximum(acc_low[...], 0.0)
        o_high = jnp.maximum(acc_high[...], 0.0)
        o_mlp = o_mlp_ref[...].astype(jnp.float32)
        out = _attention_mix(o_low, o_high, o_mlp, av_ref[...], attv_ref)
        o_ref[...] = out.astype(o_ref.dtype)


# --------------------------------------------------------------------------
# Tile selection (bounded VMEM for large N, megacore-friendly for small N)
# --------------------------------------------------------------------------
def _choose_node_tiles(n):
    n8 = _round_up(max(n, 8), 8)
    if n8 <= 1024:
        n_pad = n8
        tile_k = n_pad                       # single K step (full-extent block)
        if n_pad % 16 == 0 and n_pad >= 32:
            tile_n = n_pad // 2              # >= 2 row tiles -> 2 TCs on v7x
        else:
            tile_n = n_pad
    else:
        tile_n, tile_k = 256, 512            # bounded working set (< v7x VMEM)
        n_pad = _round_up(n, 512)
    return tile_n, tile_k, n_pad


# --------------------------------------------------------------------------
# Wrapper: pack / pad operands (bf16, minimal padding), run the two fused
# pallas_calls, slice the valid region.
# --------------------------------------------------------------------------
def graph_convolution_acmgcn(x, adj_low, adj_high, params, *,
                             high_is_identity_minus_low=False):
    n, c_in = x.shape
    c_out = params["w_low"].shape[1]
    f32, bf16 = jnp.float32, jnp.bfloat16

    c_pad = _round_up(c_out, 128)                   # lane-dense outputs
    tile_n, tile_k, n_pad = _choose_node_tiles(n)

    # Contraction tiling for kernel 1 (only needed for very wide feature dims)
    if c_in <= 2048:
        tile_ci, c_in_pad = c_in, c_in
    else:
        tile_ci, c_in_pad = 512, _round_up(c_in, 512)

    # ---- host-side packing: bf16 MXU operands, pad only what is needed ----
    x_p = x.astype(bf16)
    if (n_pad, c_in_pad) != (n, c_in):
        x_p = jnp.pad(x_p, ((0, n_pad - n), (0, c_in_pad - c_in)))

    adj_low_p = adj_low.astype(bf16)
    if n_pad != n:
        adj_low_p = jnp.pad(adj_low_p, ((0, n_pad - n), (0, n_pad - n)))

    w_cat = jnp.zeros((c_in_pad, 3 * c_pad), bf16)
    w_cat = w_cat.at[:c_in, 0:c_out].set(params["w_low"].astype(bf16))
    w_cat = w_cat.at[:c_in, c_pad:c_pad + c_out].set(params["w_high"].astype(bf16))
    w_cat = w_cat.at[:c_in, 2 * c_pad:2 * c_pad + c_out].set(params["w_mlp"].astype(bf16))

    av = jnp.zeros((3, c_pad), f32)
    av = av.at[0, :c_out].set(params["att_vec_low"][:, 0].astype(f32))
    av = av.at[1, :c_out].set(params["att_vec_high"][:, 0].astype(f32))
    av = av.at[2, :c_out].set(params["att_vec_mlp"][:, 0].astype(f32))
    att_vec = params["att_vec"].astype(f32)

    cparams = pltpu.CompilerParams(
        dimension_semantics=("parallel", "arbitrary"),
        vmem_limit_bytes=_VMEM_LIMIT_BYTES)

    n_tiles = n_pad // tile_n
    k1_tiles = c_in_pad // tile_ci
    k2_tiles = n_pad // tile_k

    # ---- kernel 1: X @ [W_low | W_high | W_mlp], K-tiled over c_in ----
    h_low, h_high, o_mlp = pl.pallas_call(
        _transform_kernel,
        grid=(n_tiles, k1_tiles),
        in_specs=[
            pl.BlockSpec((tile_n, tile_ci), lambda i, k: (i, k)),      # x rows
            pl.BlockSpec((tile_ci, 3 * c_pad), lambda i, k: (k, 0)),   # packed W
        ],
        out_specs=[
            pl.BlockSpec((tile_n, c_pad), lambda i, k: (i, 0)),
            pl.BlockSpec((tile_n, c_pad), lambda i, k: (i, 0)),
            pl.BlockSpec((tile_n, c_pad), lambda i, k: (i, 0)),
        ],
        out_shape=[
            jax.ShapeDtypeStruct((n_pad, c_pad), bf16),   # H_low  (MXU operand)
            jax.ShapeDtypeStruct((n_pad, c_pad), bf16),   # H_high (MXU operand)
            jax.ShapeDtypeStruct((n_pad, c_pad), bf16),   # relu(X W_mlp)
        ],
        scratch_shapes=[pltpu.VMEM((tile_n, 3 * c_pad), f32)],
        compiler_params=cparams,
    )(x_p, w_cat)

    # ---- kernel 2: K-tiled aggregation + attention + mixture ----
    row_spec = pl.BlockSpec((tile_n, c_pad), lambda i, k: (i, 0))
    adj_spec = pl.BlockSpec((tile_n, tile_k), lambda i, k: (i, k))
    hk_spec = pl.BlockSpec((tile_k, c_pad), lambda i, k: (k, 0))
    av_spec = pl.BlockSpec((3, c_pad), lambda i, k: (0, 0))
    smem_spec = pl.BlockSpec(memory_space=pltpu.MemorySpace.SMEM)

    common = dict(
        grid=(n_tiles, k2_tiles),
        out_specs=row_spec,
        out_shape=jax.ShapeDtypeStruct((n_pad, c_pad), f32),
        scratch_shapes=[pltpu.VMEM((tile_n, c_pad), f32),    # acc_low
                        pltpu.VMEM((tile_n, c_pad), f32)],   # acc_high
        compiler_params=cparams,
    )

    if high_is_identity_minus_low:
        # adj_high = I - adj_low (how the acmgcn branch builds it): stream
        # only adj_low; O_high = relu(H_high_row - adj_low @ H_high).
        out_p = pl.pallas_call(
            _mix_kernel_idhigh,
            in_specs=[adj_spec, hk_spec, hk_spec, row_spec, row_spec,
                      av_spec, smem_spec],
            **common,
        )(adj_low_p, h_low, h_high, h_high, o_mlp, av, att_vec)
    else:
        adj_high_p = adj_high.astype(bf16)
        if n_pad != n:
            adj_high_p = jnp.pad(adj_high_p, ((0, n_pad - n), (0, n_pad - n)))
        out_p = pl.pallas_call(
            _mix_kernel_generic,
            in_specs=[adj_spec, adj_spec, hk_spec, hk_spec, row_spec,
                      av_spec, smem_spec],
            **common,
        )(adj_low_p, adj_high_p, h_low, h_high, o_mlp, av, att_vec)

    return out_p[:n, :c_out]


# --------------------------------------------------------------------------
# Parameter construction (mirrors GraphConvolution.reset_parameters)
# --------------------------------------------------------------------------
def init_graph_convolution_params(key, in_features, out_features):
    stdv = 1.0 / (out_features ** 0.5)       # 1/sqrt(weight_mlp.size(1))
    std_att = 1.0                            # 1/sqrt(att_vec_mlp.size(1)) = 1
    std_att_vec = 1.0 / (3.0 ** 0.5)         # 1/sqrt(att_vec.size(1))
    ks = jax.random.split(key, 7)

    def u(k, shape, bound):
        return jax.random.uniform(k, shape, jnp.float32, -bound, bound)

    return {
        "w_low": u(ks[0], (in_features, out_features), stdv),
        "w_high": u(ks[1], (in_features, out_features), stdv),
        "w_mlp": u(ks[2], (in_features, out_features), stdv),
        "att_vec_low": u(ks[3], (out_features, 1), std_att),
        "att_vec_high": u(ks[4], (out_features, 1), std_att),
        "att_vec_mlp": u(ks[5], (out_features, 1), std_att),
        "att_vec": u(ks[6], (3, 3), std_att_vec),
    }


# --------------------------------------------------------------------------
# Pure-JAX f32 reference (mirrors the PyTorch forward for acm_model='acmgcn')
# --------------------------------------------------------------------------
def acmgcn_reference(x, adj_low, adj_high, p):
    hp = jax.lax.Precision.HIGHEST
    o_low = jax.nn.relu(jnp.dot(adj_low, jnp.dot(x, p["w_low"], precision=hp),
                                precision=hp))
    o_high = jax.nn.relu(jnp.dot(adj_high, jnp.dot(x, p["w_high"], precision=hp),
                                 precision=hp))
    o_mlp = jax.nn.relu(jnp.dot(x, p["w_mlp"], precision=hp))
    s = jnp.concatenate([
        jnp.dot(o_low, p["att_vec_low"], precision=hp),
        jnp.dot(o_high, p["att_vec_high"], precision=hp),
        jnp.dot(o_mlp, p["att_vec_mlp"], precision=hp)], axis=1)
    logits = jnp.dot(jax.nn.sigmoid(s), p["att_vec"], precision=hp) / 3.0
    att = jax.nn.softmax(logits, axis=1)
    return 3.0 * (att[:, 0:1] * o_low + att[:, 1:2] * o_high
                  + att[:, 2:3] * o_mlp)


# --------------------------------------------------------------------------
if __name__ == "__main__":
    key = jax.random.PRNGKey(0)

    # Small shapes consistent with the module: N nodes, dense adjacencies.
    N, in_features, out_features = 64, 16, 32

    key, kx, ka, kp = jax.random.split(key, 4)
    x = jax.random.normal(kx, (N, in_features), jnp.float32)

    a = jax.random.uniform(ka, (N, N), jnp.float32, 0.0, 1.0)
    adj_low = a / jnp.sum(a, axis=1, keepdims=True)            # low-pass filter
    adj_high = jnp.eye(N, dtype=jnp.float32) - adj_low         # high-pass filter

    params = init_graph_convolution_params(kp, in_features, out_features)

    # Fast path (exploits adj_high = I - adj_low) and generic path.
    out_fast = jax.block_until_ready(
        graph_convolution_acmgcn(x, adj_low, None, params,
                                 high_is_identity_minus_low=True))
    out_gen = jax.block_until_ready(
        graph_convolution_acmgcn(x, adj_low, adj_high, params,
                                 high_is_identity_minus_low=False))

    ref = acmgcn_reference(x, adj_low, adj_high, params)

    assert out_fast.shape == (N, out_features)
    assert out_gen.shape == (N, out_features)
    # bf16 MXU operands => looser tolerance than the HIGHEST-precision reference
    assert jnp.allclose(out_fast, ref, atol=5e-2, rtol=5e-2), \
        float(jnp.max(jnp.abs(out_fast - ref)))
    assert jnp.allclose(out_gen, ref, atol=5e-2, rtol=5e-2), \
        float(jnp.max(jnp.abs(out_gen - ref)))
    print("KERNEL_OK")
</pallas_src>

<mosaic_0001>
module attributes {stable_mosaic.version = 11 : i64} {
  func.func @_transform_kernel(%arg0: i32, %arg1: i32, %arg2: memref<32x16xbf16, #tpu.memory_space<vmem>>, %arg3: memref<16x384xbf16, #tpu.memory_space<vmem>>, %arg4: memref<32x128xbf16, #tpu.memory_space<vmem>>, %arg5: memref<32x128xbf16, #tpu.memory_space<vmem>>, %arg6: memref<32x128xbf16, #tpu.memory_space<vmem>>, %arg7: memref<32x384xf32, #tpu.memory_space<vmem>>) attributes {dimension_semantics = [#tpu.dimension_semantics<parallel>, #tpu.dimension_semantics<arbitrary>], iteration_bounds = array<i64: 2, 1>, scalar_prefetch = 0 : i64, scratch_operands = 1 : i64, tpu.core_type = #tpu.core_type<tc>, window_params = [{transform_indices = @transform_0, window_bounds = array<i64: 32, 16>}, {transform_indices = @transform_1, window_bounds = array<i64: 16, 384>}, {transform_indices = @transform_2, window_bounds = array<i64: 32, 128>}, {transform_indices = @transform_3, window_bounds = array<i64: 32, 128>}, {transform_indices = @transform_4, window_bounds = array<i64: 32, 128>}]} {
    %c0_i32 = arith.constant 0 : i32
    %0 = arith.cmpi eq, %arg1, %c0_i32 : i32
    %1 = arith.extui %0 : i1 to i32
    %c0_i32_0 = arith.constant 0 : i32
    %2 = arith.cmpi ne, %1, %c0_i32_0 : i32
    scf.if %2 {
      %cst_10 = arith.constant 0.000000e+00 : f32
      %12 = vector.broadcast %cst_10 : f32 to vector<32x384xf32>
      %c0_11 = arith.constant 0 : index
      %c0_12 = arith.constant 0 : index
      %13 = vector.load %arg7[%c0_11, %c0_12] : memref<32x384xf32, #tpu.memory_space<vmem>>, vector<32x384xf32>
      tpu.vector_store %arg7[%c0_11, %c0_12], %12 {strides = array<i32>} : memref<32x384xf32, #tpu.memory_space<vmem>>, vector<32x384xf32>,
    } else {
    }
    %c0 = arith.constant 0 : index
    %c0_1 = arith.constant 0 : index
    %3 = vector.load %arg7[%c0, %c0_1] : memref<32x384xf32, #tpu.memory_space<vmem>>, vector<32x384xf32>
    %c0_2 = arith.constant 0 : index
    %c0_3 = arith.constant 0 : index
    %4 = vector.load %arg2[%c0_2, %c0_3] : memref<32x16xbf16, #tpu.memory_space<vmem>>, vector<32x16xbf16>
    %c0_4 = arith.constant 0 : index
    %c0_5 = arith.constant 0 : index
    %5 = vector.load %arg3[%c0_4, %c0_5] : memref<16x384xbf16, #tpu.memory_space<vmem>>, vector<16x384xbf16>
    %cst = arith.constant dense<0.000000e+00> : vector<32x384xf32>
    %6 = tpu.matmul %4, %5, %cst {dimension_numbers = #tpu.dot_dimension_numbers<[1], [0], [0], [1], [0, 0, 1, 1], [], []>} : vector<32x16xbf16>, vector<16x384xbf16>, vector<32x384xf32> -> vector<32x384xf32>
    %7 = arith.addf %3, %6 : vector<32x384xf32>
    %c0_6 = arith.constant 0 : index
    %c0_7 = arith.constant 0 : index
    %8 = vector.load %arg7[%c0_6, %c0_7] : memref<32x384xf32, #tpu.memory_space<vmem>>, vector<32x384xf32>
    tpu.vector_store %arg7[%c0_6, %c0_7], %7 {strides = array<i32>} : memref<32x384xf32, #tpu.memory_space<vmem>>, vector<32x384xf32>,
    %c0_i32_8 = arith.constant 0 : i32
    %9 = arith.cmpi eq, %arg1, %c0_i32_8 : i32
    %10 = arith.extui %9 : i1 to i32
    %c0_i32_9 = arith.constant 0 : i32
    %11 = arith.cmpi ne, %10, %c0_i32_9 : i32
    scf.if %11 {
      %c0_10 = arith.constant 0 : index
      %c0_11 = arith.constant 0 : index
      %12 = vector.load %arg7[%c0_10, %c0_11] : memref<32x384xf32, #tpu.memory_space<vmem>>, vector<32x384xf32>
      %13 = vector.extract_strided_slice %12 {offsets = [0, 0], sizes = [32, 128], strides = [1, 1]} : vector<32x384xf32> to vector<32x128xf32>
      %14 = arith.truncf %13 : vector<32x128xf32> to vector<32x128xbf16>
      %c0_12 = arith.constant 0 : index
      %c0_13 = arith.constant 0 : index
      %15 = vector.load %arg4[%c0_12, %c0_13] : memref<32x128xbf16, #tpu.memory_space<vmem>>, vector<32x128xbf16>
      tpu.vector_store %arg4[%c0_12, %c0_13], %14 {strides = array<i32>} : memref<32x128xbf16, #tpu.memory_space<vmem>>, vector<32x128xbf16>,
      %16 = vector.extract_strided_slice %12 {offsets = [0, 128], sizes = [32, 128], strides = [1, 1]} : vector<32x384xf32> to vector<32x128xf32>
      %17 = arith.truncf %16 : vector<32x128xf32> to vector<32x128xbf16>
      %c0_14 = arith.constant 0 : index
      %c0_15 = arith.constant 0 : index
      %18 = vector.load %arg5[%c0_14, %c0_15] : memref<32x128xbf16, #tpu.memory_space<vmem>>, vector<32x128xbf16>
      tpu.vector_store %arg5[%c0_14, %c0_15], %17 {strides = array<i32>} : memref<32x128xbf16, #tpu.memory_space<vmem>>, vector<32x128xbf16>,
      %19 = vector.extract_strided_slice %12 {offsets = [0, 256], sizes = [32, 128], strides = [1, 1]} : vector<32x384xf32> to vector<32x128xf32>
      %cst_16 = arith.constant 0.000000e+00 : f32
      %20 = vector.broadcast %cst_16 : f32 to vector<32x128xf32>
      %21 = arith.maximumf %19, %20 : vector<32x128xf32>
      %22 = arith.truncf %21 : vector<32x128xf32> to vector<32x128xbf16>
      %c0_17 = arith.constant 0 : index
      %c0_18 = arith.constant 0 : index
      %23 = vector.load %arg6[%c0_17, %c0_18] : memref<32x128xbf16, #tpu.memory_space<vmem>>, vector<32x128xbf16>
      tpu.vector_store %arg6[%c0_17, %c0_18], %22 {strides = array<i32>} : memref<32x128xbf16, #tpu.memory_space<vmem>>, vector<32x128xbf16>,
    } else {
    }
    return
  }
  func.func @transform_0(%arg0: i32, %arg1: i32) -> (i32, i32) {
    %c0_i32 = arith.constant 0 : i32
    return %arg0, %arg1 : i32, i32
  }
  func.func @transform_1(%arg0: i32, %arg1: i32) -> (i32, i32) {
    %c0_i32 = arith.constant 0 : i32
    %c0_i32_0 = arith.constant 0 : i32
    return %arg1, %c0_i32 : i32, i32
  }
  func.func @transform_2(%arg0: i32, %arg1: i32) -> (i32, i32) {
    %c0_i32 = arith.constant 0 : i32
    %c0_i32_0 = arith.constant 0 : i32
    return %arg0, %c0_i32 : i32, i32
  }
  func.func @transform_3(%arg0: i32, %arg1: i32) -> (i32, i32) {
    %c0_i32 = arith.constant 0 : i32
    %c0_i32_0 = arith.constant 0 : i32
    return %arg0, %c0_i32 : i32, i32
  }
  func.func @transform_4(%arg0: i32, %arg1: i32) -> (i32, i32) {
    %c0_i32 = arith.constant 0 : i32
    %c0_i32_0 = arith.constant 0 : i32
    return %arg0, %c0_i32 : i32, i32
  }
}

</mosaic_0001>

<llo_original>
// kernel: tpu_custom_call.1
$region0: #{tpu_custom_call.1}
  #allocation0 [shape = 'u32[]', space=smem, size = 0x4, offset = 0x4, fixed_abs, tag = 'smem constant byte address 0x4 - core index']
  #allocation1 [shape = 'u32[144,128]{1,0:T(1,128)}', space=vmem, size = 0x12000, scoped, tag = 'internal scratch']
  #allocation2 [shape = 'f32[32,384]{1,0:T(8,128)}', space=vmem, size = 0xc000, scoped, tag = 'scratch operand']
  %s0 = inlined_call_operand.vmem [shape: bf16[64,16], index: 0, kind: input, shape index: {}]
  %s1 = inlined_call_operand.vmem [shape: bf16[16,384], index: 1, kind: input, shape index: {}]
  %s2 = inlined_call_operand.hbm [shape: bf16[64,128], index: 2, kind: output, shape index: {0}]
  %s3 = inlined_call_operand.hbm [shape: bf16[64,128], index: 3, kind: output, shape index: {1}]
  %s4 = inlined_call_operand.hbm [shape: bf16[64,128], index: 4, kind: output, shape index: {2}]
  %5 = xla_tuple %s2, %s3, %s4
  %s6 = sld [smem:[#allocation0]]
  $region65: #{tpu_custom_call.1} parent=0
    _
  %s8 = ssub.s32 1, %s6
  %s9 = scalar_select 0, %s8, %s6
  $region1: #{tpu_custom_call.1} parent=0
    #allocation3 [shape = 'u8[16384]{0}', space=vmem, size = 0x4000, scoped, tag = 'output window, operand 0']
    #allocation4 [shape = 's32[2]{0}', space=sflag, size = 0x8, scoped, tag = 'scoped memory for tpu_custom_call.1']
    #allocation5 [shape = 'u8[16384]{0}', space=vmem, size = 0x4000, scoped, tag = 'output window, operand 1']
    #allocation6 [shape = 's32[2]{0}', space=sflag, size = 0x8, scoped, tag = 'scoped memory for tpu_custom_call.1']
    #allocation7 [shape = 'u8[16384]{0}', space=vmem, size = 0x4000, scoped, tag = 'output window, operand 2']
    %10 = vsyncpa [#allocation4], 0
    %s11 = scalar_lea.sflag [#allocation4], 1
    %12 = vsyncpa %s11, 0
    %13 = vsyncpa [#allocation6], 0
    %s14 = scalar_lea.sflag [#allocation6], 1
    %15 = vsyncpa %s14, 0
    loop: start=0, step=1, limit=4
    $region2: #{tpu_custom_call.1} parent=1 // loop_pre_header
      _
    $region3: #{tpu_custom_call.1} parent=1 // loop_header
      %s17 = sphi 0, %s21
      %p18 = scmp.ge.s32.totalorder %s17, 4
      %s24 = sphi 0, %s36
      %s25 = sphi 0, %s32
      %s26 = sphi 0, %s24
      %s27 = sphi 0, %s25
      %s28 = sphi 0, %s26
      %s29 = sphi 0, %s27
      %s41 = sphi 0, %s43
      %s44 = sphi 0, %s41
      %s45 = sphi 0, %s44
      %s61 = sphi 0, %s45
      %s67 = sphi 0, %s69
      %s70 = sphi 0, %s67
      %s71 = sphi 0, %s70
      %s87 = sphi 0, %s71
      %s93 = sphi 0, %s95
      %s96 = sphi 0, %s93
      %s97 = sphi 0, %s96
      %s113 = sphi 0, %s97
      %s119 = sphi 0, %s121
      %s122 = sphi 0, %s119
      %s123 = sphi 0, %s122
      %s139 = sphi 0, %s123
      %s145 = sphi 0, %s147
      %s148 = sphi 0, %s145
      %s149 = sphi 0, %s148
      %s165 = sphi 0, %s149
    $region4: #{tpu_custom_call.1} parent=1 // loop_header_branch
      %20 = sbr.rel (%p18) target = $region8
    $region5: #{tpu_custom_call.1} parent=1 // loop_body
      %s22 = ssub.s32 %s17, 1
      %s23 = ssub.s32 %s17, 2
      %s30 = sadd.s32 1, %s25
      %p31 = scmp.ge.s32.totalorder %s30, 1
      %s32 = scalar_select %p31, 0, %s30
      %s33 = sadd.s32 1, %s24
      %s34 = scalar_select %p31, %s33, %s24
      %p35 = scmp.ge.s32.totalorder %s34, 2
      %s36 = scalar_select %p35, 0, %s34
      %s37 = ssub.s32 %s24, %s36
      %s38 = ssub.s32 %s25, %s32
      %s39 = sor.u32 %s37, %s38
      %p40 = scmp.eq.s32.totalorder %s39, 0
      %s42 = sadd.s32 %s41, 1
      %s43 = scalar_select %p40, %s41, %s42
      %p46 = pneg %p40
      %p47 = scmp.eq.s32.totalorder %s17, 1
      %p48 = por %p46, %p47
      %p49 = scmp.ne.s32.totalorder %s41, %s44
      %p50 = scmp.eq.s32.totalorder %s17, 0
      %p51 = por %p49, %p50
      %p52 = scmp.ne.s32.totalorder %s41, %s44
      %p53 = scmp.eq.s32.totalorder %s22, 1
      %p54 = por %p52, %p53
      %p55 = scmp.ne.s32.totalorder %s44, %s45
      %p56 = scmp.eq.s32.totalorder %s22, 0
      %p57 = por %p55, %p56
      %p58 = scmp.ne.s32.totalorder %s44, %s45
      %p59 = scmp.eq.s32.totalorder %s23, 1
      %p60 = por %p58, %p59
      %p62 = scmp.ne.s32.totalorder %s45, %s61
      %p63 = scmp.eq.s32.totalorder %s23, 0
      %p64 = por %p62, %p63
      %s65 = ssub.s32 %s25, %s32
      %p66 = scmp.eq.s32.totalorder %s65, 0
      %s68 = sadd.s32 %s67, 1
      %s69 = scalar_select %p66, %s67, %s68
      %p72 = pneg %p66
      %p73 = scmp.eq.s32.totalorder %s17, 1
      %p74 = por %p72, %p73
      %p75 = scmp.ne.s32.totalorder %s67, %s70
      %p76 = scmp.eq.s32.totalorder %s17, 0
      %p77 = por %p75, %p76
      %p78 = scmp.ne.s32.totalorder %s67, %s70
      %p79 = scmp.eq.s32.totalorder %s22, 1
      %p80 = por %p78, %p79
      %p81 = scmp.ne.s32.totalorder %s70, %s71
      %p82 = scmp.eq.s32.totalorder %s22, 0
      %p83 = por %p81, %p82
      %p84 = scmp.ne.s32.totalorder %s70, %s71
      %p85 = scmp.eq.s32.totalorder %s23, 1
      %p86 = por %p84, %p85
      %p88 = scmp.ne.s32.totalorder %s71, %s87
      %p89 = scmp.eq.s32.totalorder %s23, 0
      %p90 = por %p88, %p89
      %s91 = ssub.s32 %s24, %s36
      %p92 = scmp.eq.s32.totalorder %s91, 0
      %s94 = sadd.s32 %s93, 1
      %s95 = scalar_select %p92, %s93, %s94
      %p98 = pneg %p92
      %p99 = scmp.eq.s32.totalorder %s17, 1
      %p100 = por %p98, %p99
      %p101 = scmp.ne.s32.totalorder %s93, %s96
      %p102 = scmp.eq.s32.totalorder %s17, 0
      %p103 = por %p101, %p102
      %p104 = scmp.ne.s32.totalorder %s93, %s96
      %p105 = scmp.eq.s32.totalorder %s22, 1
      %p106 = por %p104, %p105
      %p107 = scmp.ne.s32.totalorder %s96, %s97
      %p108 = scmp.eq.s32.totalorder %s22, 0
      %p109 = por %p107, %p108
      %p110 = scmp.ne.s32.totalorder %s96, %s97
      %p111 = scmp.eq.s32.totalorder %s23, 1
      %p112 = por %p110, %p111
      %p114 = scmp.ne.s32.totalorder %s97, %s113
      %p115 = scmp.eq.s32.totalorder %s23, 0
      %p116 = por %p114, %p115
      %s117 = ssub.s32 %s24, %s36
      %p118 = scmp.eq.s32.totalorder %s117, 0
      %s120 = sadd.s32 %s119, 1
      %s121 = scalar_select %p118, %s119, %s120
      %p124 = pneg %p118
      %p125 = scmp.eq.s32.totalorder %s17, 1
      %p126 = por %p124, %p125
      %p127 = scmp.ne.s32.totalorder %s119, %s122
      %p128 = scmp.eq.s32.totalorder %s17, 0
      %p129 = por %p127, %p128
      %p130 = scmp.ne.s32.totalorder %s119, %s122
      %p131 = scmp.eq.s32.totalorder %s22, 1
      %p132 = por %p130, %p131
      %p133 = scmp.ne.s32.totalorder %s122, %s123
      %p134 = scmp.eq.s32.totalorder %s22, 0
      %p135 = por %p133, %p134
      %p136 = scmp.ne.s32.totalorder %s122, %s123
      %p137 = scmp.eq.s32.totalorder %s23, 1
      %p138 = por %p136, %p137
      %p140 = scmp.ne.s32.totalorder %s123, %s139
      %p141 = scmp.eq.s32.totalorder %s23, 0
      %p142 = por %p140, %p141
      %s143 = ssub.s32 %s24, %s36
      %p144 = scmp.eq.s32.totalorder %s143, 0
      %s146 = sadd.s32 %s145, 1
      %s147 = scalar_select %p144, %s145, %s146
      %p150 = pneg %p144
      %p151 = scmp.eq.s32.totalorder %s17, 1
      %p152 = por %p150, %p151
      %p153 = scmp.ne.s32.totalorder %s145, %s148
      %p154 = scmp.eq.s32.totalorder %s17, 0
      %p155 = por %p153, %p154
      %p156 = scmp.ne.s32.totalorder %s145, %s148
      %p157 = scmp.eq.s32.totalorder %s22, 1
      %p158 = por %p156, %p157
      %p159 = scmp.ne.s32.totalorder %s148, %s149
      %p160 = scmp.eq.s32.totalorder %s22, 0
      %p161 = por %p159, %p160
      %p162 = scmp.ne.s32.totalorder %s148, %s149
      %p163 = scmp.eq.s32.totalorder %s23, 1
      %p164 = por %p162, %p163
      %p166 = scmp.ne.s32.totalorder %s149, %s165
      %p167 = scmp.eq.s32.totalorder %s23, 0
      %p168 = por %p166, %p167
      %p169 = scmp.le.s32.totalorder 1, %s17
      %p170 = scmp.lt.s32.totalorder %s17, 3
      %p171 = pnand %p169, %p170
      %p172 = pneg %p171
      // Predicated region
      $region9: #{tpu_custom_call.1} parent=5 // pred_check
        _
      $region10: #{tpu_custom_call.1} parent=5 // pred_check_branch
        %174 = sbr.rel (%p171) target = $region12
      $region11: #{tpu_custom_call.1} parent=5 // pred_region
        %s175 = ssub.s32 %s17, 1
        // Predicated region
        $region13: #{tpu_custom_call.1} parent=11 // pred_check
          %p176 = pneg %p83
        $region14: #{tpu_custom_call.1} parent=11 // pred_check_branch
          %178 = sbr.rel (%p176) target = $region16
        $region15: #{tpu_custom_call.1} parent=11 // pred_region
          %s179 = smul.u32 2, %s27
          %p180 = scmp.lt.s32.totalorder %s179, 1
          %s181 = scalar_select %p180, %s179, 1
          %s182 = smul.addr %s181, 3
          %s183 = smul.addr %s182, 4
          %s184 = scalar_lea.vmem %s1, %s183
          %s185 = smul.u32 2, %s27
        $region16: #{tpu_custom_call.1} parent=11 // pred_fallthru
          _
      $region12: #{tpu_custom_call.1} parent=5 // pred_fallthru
        _
      %p186 = scmp.lt.s32.totalorder %s17, 2
      // Predicated region
      $region17: #{tpu_custom_call.1} parent=5 // pred_check
        %p187 = pneg %p186
      $region18: #{tpu_custom_call.1} parent=5 // pred_check_branch
        %189 = sbr.rel (%p187) target = $region20
      $region19: #{tpu_custom_call.1} parent=5 // pred_region
        // Predicated region
        $region21: #{tpu_custom_call.1} parent=19 // pred_check
          %p190 = pneg %p51
        $region22: #{tpu_custom_call.1} parent=19 // pred_check_branch
          %192 = sbr.rel (%p190) target = $region24
        $region23: #{tpu_custom_call.1} parent=19 // pred_region
          %s193 = smul.u32 4, %s24
          %p194 = scmp.lt.s32.totalorder %s193, 7
          %s195 = scalar_select %p194, %s193, 7
          %p196 = scmp.lt.s32.totalorder %s25, 0
          %s197 = scalar_select %p196, %s25, 0
          %s198 = sadd.s32 %s197, %s195
          %s199 = smul.addr %s198, 4
          %s200 = scalar_lea.vmem %s0, %s199
          %s201 = smul.u32 4, %s24
        $region24: #{tpu_custom_call.1} parent=19 // pred_fallthru
          _
      $region20: #{tpu_custom_call.1} parent=5 // pred_fallthru
        _
      %p202 = scmp.le.s32.totalorder 1, %s17
      %p203 = scmp.lt.s32.totalorder %s17, 3
      %p204 = pnand %p202, %p203
      %p205 = pneg %p204
      // Predicated region
      $region25: #{tpu_custom_call.1} parent=5 // pred_check
        _
      $region26: #{tpu_custom_call.1} parent=5 // pred_check_branch
        %207 = sbr.rel (%p204) target = $region28
      $region27: #{tpu_custom_call.1} parent=5 // pred_region
        %s208 = ssub.s32 %s17, 1
        %s209 = smul.u32 4, %s26
        %p210 = scmp.lt.s32.totalorder %s209, 7
        %s211 = scalar_select %p210, %s209, 7
        %p212 = scmp.lt.s32.totalorder %s27, 0
        %s213 = scalar_select %p212, %s27, 0
        %s214 = sadd.s32 %s213, %s211
        %s215 = smul.addr %s214, 4
        %s216 = scalar_lea.vmem %s0, %s215
        %p217 = pneg %p57
        %p218 = pneg %p54
        %s219 = smul.u32 2, %s27
        %p220 = scmp.lt.s32.totalorder %s219, 1
        %s221 = scalar_select %p220, %s219, 1
        %s222 = smul.addr %s221, 3
        %s223 = smul.addr %s222, 4
        %s224 = scalar_lea.vmem %s1, %s223
        %p225 = pneg %p83
        %p226 = pneg %p80
        %p227 = pneg %p109
        %p228 = pneg %p106
        %s229 = sand.u32 %s96, 1
        %s230 = scalar_lea.sflag [#allocation4], %s229
        %s231 = sand.u32 %s96, 1
        %s232 = smul.addr %s231, 16
        %s233 = scalar_lea.vmem [#allocation3], %s232
        %p234 = pneg %p135
        %p235 = pneg %p132
        %s236 = sand.u32 %s22, 1
        %s237 = scalar_lea.sflag [#allocation6], %s236
        %s238 = sand.u32 %s122, 1
        %s239 = smul.addr %s238, 16
        %s240 = scalar_lea.vmem [#allocation5], %s239
        %p241 = pneg %p161
        %p242 = pneg %p158
        %s243 = sand.u32 %s22, 1
        %s244 = scalar_lea.sflag [#allocation6], %s243
        %s245 = sand.u32 %s148, 1
        %s246 = smul.addr %s245, 16
        %s247 = scalar_lea.vmem [#allocation7], %s246
        %s248 = smul.u32 4, %s26
        %p249 = scmp.lt.s32.totalorder %s248, 7
        %s250 = scalar_select %p249, %s248, 7
        %p251 = scmp.lt.s32.totalorder %s27, 0
        %s252 = scalar_select %p251, %s27, 0
        %s253 = sadd.s32 %s252, %s250
        %s254 = smul.addr %s253, 4
        %s255 = scalar_lea.vmem %s0, %s254
        %s256 = smul.u32 4, %s26
        %s257 = smul.u32 2, %s27
        %p258 = scmp.lt.s32.totalorder %s257, 1
        %s259 = scalar_select %p258, %s257, 1
        %s260 = smul.addr %s259, 3
        %s261 = smul.addr %s260, 4
        %s262 = scalar_lea.vmem %s1, %s261
        %s263 = smul.u32 2, %s27
        %s264 = smul.u32 4, %s26
        %s265 = smul.u32 4, %s26
        %s266 = smul.u32 4, %s26
        %p268 = scmp.eq.s32.totalorder %s27, 0
        // Predicated region
        $region29: #{tpu_custom_call.1} parent=27 // pred_check
          %p269 = pneg %p268
        $region30: #{tpu_custom_call.1} parent=27 // pred_check_branch
          %271 = sbr.rel (%p269) target = $region32
        $region31: #{tpu_custom_call.1} parent=27 // pred_region
          %272 = vst [vmem:[#allocation2] sm:$0xff] 0.0
          %273 = vst [vmem:[#allocation2 + $0x8] sm:$0xff] 0.0
          %274 = vst [vmem:[#allocation2 + $0x10] sm:$0xff] 0.0
          %275 = vst [vmem:[#allocation2 + $0x18] sm:$0xff] 0.0
          %276 = vst [vmem:[#allocation2 + $0x20] sm:$0xff] 0.0
          %277 = vst [vmem:[#allocation2 + $0x28] sm:$0xff] 0.0
          %278 = vst [vmem:[#allocation2 + $0x30] sm:$0xff] 0.0
          %279 = vst [vmem:[#allocation2 + $0x38] sm:$0xff] 0.0
          %280 = vst [vmem:[#allocation2 + $0x40] sm:$0xff] 0.0
          %281 = vst [vmem:[#allocation2 + $0x48] sm:$0xff] 0.0
          %282 = vst [vmem:[#allocation2 + $0x50] sm:$0xff] 0.0
          %283 = vst [vmem:[#allocation2 + $0x58] sm:$0xff] 0.0
        $region32: #{tpu_custom_call.1} parent=27 // pred_fallthru
          _
        %v284 = vld [vmem:[#allocation2] sm:$0xff]
        %v285 = vld [vmem:[#allocation2 + $0x8] sm:$0xff]
        %v286 = vld [vmem:[#allocation2 + $0x10] sm:$0xff]
        %v287 = vld [vmem:[#allocation2 + $0x18] sm:$0xff]
        %v288 = vld [vmem:[#allocation2 + $0x20] sm:$0xff]
        %v289 = vld [vmem:[#allocation2 + $0x28] sm:$0xff]
        %v290 = vld [vmem:[#allocation2 + $0x30] sm:$0xff]
        %v291 = vld [vmem:[#allocation2 + $0x38] sm:$0xff]
        %v292 = vld [vmem:[#allocation2 + $0x40] sm:$0xff]
        %v293 = vld [vmem:[#allocation2 + $0x48] sm:$0xff]
        %v294 = vld [vmem:[#allocation2 + $0x50] sm:$0xff]
        %v295 = vld [vmem:[#allocation2 + $0x58] sm:$0xff]
        %v296 = vld [vmem:[%s255] sm:$0xf]
        %v297 = vld [vmem:[%s255 + $0x4] sm:$0xf]
        %v298 = vld [vmem:[%s255 + $0x8] sm:$0xf]
        %v299 = vld [vmem:[%s255 + $0xc] sm:$0xf]
        %v300 = vld [vmem:[%s262] sm:$0xff]
        %v301 = vld [vmem:[%s262 + $0x8] sm:$0xf]
        %v302 = vld [vmem:[%s262 + $0xc] sm:$0xff]
        %v303 = vld [vmem:[%s262 + $0x14] sm:$0xf]
        %v308 = vunpack.c.l.b16 %v296
        %v309 = vunpack.c.l.b16 %v297
        %v310 = vunpack.c.l.b16 %v298
        %v311 = vunpack.c.l.b16 %v299
        %v312 = vpack.c.b16 %v309, %v308
        %v313 = vpack.c.b16 %v311, %v310
        %v318 = vunpack.c.l.b16 %v300
        %v319 = vunpack.c.h.b16 %v300
        %v320 = vunpack.c.l.b16 %v301
        %v321 = vunpack.c.l.b16 %v302
        %v322 = vunpack.c.h.b16 %v302
        %v323 = vunpack.c.l.b16 %v303
        %v324 = vpack.c.b16 %v321, %v318
        %v325 = vpack.c.b16 %v322, %v319
        %v326 = vpack.c.b16 %v323, %v320
        %vm330 = vcmask 130048
        %v332 = vsel %vm330, %v312, 0
        %v335 = vsel %vm330, %v313, 0
        %337 = vmatprep.subr.bf16.mxu0 %v325
        %338 = vmatpush1.bf16.msra.mxu0 %v324
        %339 = vmatprep.subr.bf16.mxu0 0
        %340 = vmatpush1.bf16.msra.mxu0 0
        %341 = vmatprep.subr.bf16.mxu0 0
        %342 = vmatpush1.bf16.msra.mxu0 0
        %343 = vmatprep.subr.bf16.mxu0 0
        %344 = vmatpush1.bf16.msra.mxu0 0
        %345 = vmatprep.subr.bf16.mxu0 0
        %346 = vmatpush1.bf16.msra.mxu0 0
        %347 = vmatprep.subr.bf16.mxu0 0
        %348 = vmatpush1.bf16.msra.mxu0 0
        %349 = vmatprep.subr.bf16.mxu0 0
        %350 = vmatpush1.bf16.msra.mxu0 0
        %351 = vmatprep.subr.bf16.mxu0 0
        %352 = vmatpush1.bf16.msra.mxu0 0
        %353 = vmatprep.subr.bf16.mxu0 0
        %354 = vmatpush1.bf16.msra.mxu0 0
        %355 = vmatprep.subr.bf16.mxu0 0
        %356 = vmatpush1.bf16.msra.mxu0 0
        %357 = vmatprep.subr.bf16.mxu0 0
        %358 = vmatpush1.bf16.msra.mxu0 0
        %359 = vmatprep.subr.bf16.mxu0 0
        %360 = vmatpush1.bf16.msra.mxu0 0
        %361 = vmatprep.subr.bf16.mxu0 0
        %362 = vmatpush1.bf16.msra.mxu0 0
        %363 = vmatprep.subr.bf16.mxu0 0
        %364 = vmatpush1.bf16.msra.mxu0 0
        %365 = vmatprep.subr.bf16.mxu0 0
        %366 = vmatpush1.bf16.msra.mxu0 0
        %367 = vmatprep.subr.bf16.mxu0 0
        %368 = vmatpush1.bf16.msra.mxu0 0
        %369 = vmatprep.mubr.bf16.mxu0 0
        %370 = vmatmul.mubr.bf16.gmra.mrb[0].mxu0 %v332
        %v371 = vpop.f32.mrb[0].mxu0
        %v372 = vadd.f32 0.0, %v371
        %v373 = vpop.f32.mrb[0].mxu0
        %v374 = vadd.f32 0.0, %v373
        %v375 = vpop.f32.mrb[0].mxu0
        %v376 = vadd.f32 0.0, %v375
        %v377 = vpop.f32.mrb[0].mxu0
        %v378 = vadd.f32 0.0, %v377
        %379 = vmatprep.mubr.bf16.mxu0 0
        %380 = vmatmul.mubr.bf16.gmra.mrb[0].mxu0 %v335
        %v381 = vpop.f32.mrb[0].mxu0
        %v382 = vadd.f32 0.0, %v381
        %v383 = vpop.f32.mrb[0].mxu0
        %v384 = vadd.f32 0.0, %v383
        %v385 = vpop.f32.mrb[0].mxu0
        %v386 = vadd.f32 0.0, %v385
        %v387 = vpop.f32.mrb[0].mxu0
        %v388 = vadd.f32 0.0, %v387
        %389 = vdwg.mxu0
        %390 = vmatprep.subr.bf16.mxu0 0
        %391 = vmatpush1.bf16.msra.mxu0 %v326
        %392 = vmatprep.subr.bf16.mxu0 0
        %393 = vmatpush1.bf16.msra.mxu0 0
        %394 = vmatprep.subr.bf16.mxu0 0
        %395 = vmatpush1.bf16.msra.mxu0 0
        %396 = vmatprep.subr.bf16.mxu0 0
        %397 = vmatpush1.bf16.msra.mxu0 0
        %398 = vmatprep.subr.bf16.mxu0 0
        %399 = vmatpush1.bf16.msra.mxu0 0
        %400 = vmatprep.subr.bf16.mxu0 0
        %401 = vmatpush1.bf16.msra.mxu0 0
        %402 = vmatprep.subr.bf16.mxu0 0
        %403 = vmatpush1.bf16.msra.mxu0 0
        %404 = vmatprep.subr.bf16.mxu0 0
        %405 = vmatpush1.bf16.msra.mxu0 0
        %406 = vmatprep.subr.bf16.mxu0 0
        %407 = vmatpush1.bf16.msra.mxu0 0
        %408 = vmatprep.subr.bf16.mxu0 0
        %409 = vmatpush1.bf16.msra.mxu0 0
        %410 = vmatprep.subr.bf16.mxu0 0
        %411 = vmatpush1.bf16.msra.mxu0 0
        %412 = vmatprep.subr.bf16.mxu0 0
        %413 = vmatpush1.bf16.msra.mxu0 0
        %414 = vmatprep.subr.bf16.mxu0 0
        %415 = vmatpush1.bf16.msra.mxu0 0
        %416 = vmatprep.subr.bf16.mxu0 0
        %417 = vmatpush1.bf16.msra.mxu0 0
        %418 = vmatprep.subr.bf16.mxu0 0
        %419 = vmatpush1.bf16.msra.mxu0 0
        %420 = vmatprep.subr.bf16.mxu0 0
        %421 = vmatpush1.bf16.msra.mxu0 0
        %422 = vmatprep.mubr.bf16.mxu0 0
        %423 = vmatmul.mubr.bf16.gmra.mrb[0].mxu0 %v332
        %v424 = vpop.f32.mrb[0].mxu0
        %v425 = vadd.f32 0.0, %v424
        %v426 = vpop.f32.mrb[0].mxu0
        %v427 = vpop.f32.mrb[0].mxu0
        %v428 = vadd.f32 0.0, %v427
        %v429 = vpop.f32.mrb[0].mxu0
        %430 = vmatprep.mubr.bf16.mxu0 0
        %431 = vmatmul.mubr.bf16.gmra.mrb[0].mxu0 %v335
        %v432 = vpop.f32.mrb[0].mxu0
        %v433 = vadd.f32 0.0, %v432
        %v434 = vpop.f32.mrb[0].mxu0
        %v435 = vpop.f32.mrb[0].mxu0
        %v436 = vadd.f32 0.0, %v435
        %v437 = vpop.f32.mrb[0].mxu0
        %438 = vdwg.mxu0
        %v439 = vadd.f32 %v284, %v372
        %v440 = vadd.f32 %v285, %v374
        %v441 = vadd.f32 %v286, %v425
        %v442 = vadd.f32 %v287, %v376
        %v443 = vadd.f32 %v288, %v378
        %v444 = vadd.f32 %v289, %v428
        %v445 = vadd.f32 %v290, %v382
        %v446 = vadd.f32 %v291, %v384
        %v447 = vadd.f32 %v292, %v433
        %v448 = vadd.f32 %v293, %v386
        %v449 = vadd.f32 %v294, %v388
        %v450 = vadd.f32 %v295, %v436
        %451 = vst [vmem:[#allocation2] sm:$0xff] %v439
        %452 = vst [vmem:[#allocation2 + $0x8] sm:$0xff] %v440
        %453 = vst [vmem:[#allocation2 + $0x10] sm:$0xff] %v441
        %454 = vst [vmem:[#allocation2 + $0x18] sm:$0xff] %v442
        %455 = vst [vmem:[#allocation2 + $0x20] sm:$0xff] %v443
        %456 = vst [vmem:[#allocation2 + $0x28] sm:$0xff] %v444
        %457 = vst [vmem:[#allocation2 + $0x30] sm:$0xff] %v445
        %458 = vst [vmem:[#allocation2 + $0x38] sm:$0xff] %v446
        %459 = vst [vmem:[#allocation2 + $0x40] sm:$0xff] %v447
        %460 = vst [vmem:[#allocation2 + $0x48] sm:$0xff] %v448
        %461 = vst [vmem:[#allocation2 + $0x50] sm:$0xff] %v449
        %462 = vst [vmem:[#allocation2 + $0x58] sm:$0xff] %v450
        // Predicated region
        $region33: #{tpu_custom_call.1} parent=27 // pred_check
          %p463 = pneg %p268
        $region34: #{tpu_custom_call.1} parent=27 // pred_check_branch
          %465 = sbr.rel (%p463) target = $region36
        $region35: #{tpu_custom_call.1} parent=27 // pred_region
          %v466 = vld [vmem:[#allocation2] sm:$0xff]
          %v467 = vld [vmem:[#allocation2 + $0x8] sm:$0xff]
          %v468 = vld [vmem:[#allocation2 + $0x10] sm:$0xff]
          %v469 = vld [vmem:[#allocation2 + $0x18] sm:$0xff]
          %v470 = vld [vmem:[#allocation2 + $0x20] sm:$0xff]
          %v471 = vld [vmem:[#allocation2 + $0x28] sm:$0xff]
          %v472 = vld [vmem:[#allocation2 + $0x30] sm:$0xff]
          %v473 = vld [vmem:[#allocation2 + $0x38] sm:$0xff]
          %v474 = vld [vmem:[#allocation2 + $0x40] sm:$0xff]
          %v475 = vld [vmem:[#allocation2 + $0x48] sm:$0xff]
          %v476 = vld [vmem:[#allocation2 + $0x50] sm:$0xff]
          %v477 = vld [vmem:[#allocation2 + $0x58] sm:$0xff]
          %v478 = vpack.c.bf16 %v469, %v466
          %v479 = vpack.c.bf16 %v475, %v472
          %v482 = vunpack.c.l.b16 %v478
          %v483 = vunpack.c.h.b16 %v478
          %v484 = vunpack.c.l.b16 %v479
          %v485 = vunpack.c.h.b16 %v479
          %v486 = vpack.c.b16 %v482, %v482
          %v487 = vpack.c.b16 %v483, %v483
          %v488 = vpack.c.b16 %v484, %v484
          %v489 = vpack.c.b16 %v485, %v485
          %494 = vst [vmem:[%s233] sm:$0xf] %v486
          %495 = vst [vmem:[%s233 + $0x4] sm:$0xf] %v487
          %496 = vst [vmem:[%s233 + $0x8] sm:$0xf] %v488
          %497 = vst [vmem:[%s233 + $0xc] sm:$0xf] %v489
          %v498 = vpack.c.bf16 %v470, %v467
          %v499 = vpack.c.bf16 %v476, %v473
          %v502 = vunpack.c.l.b16 %v498
          %v503 = vunpack.c.h.b16 %v498
          %v504 = vunpack.c.l.b16 %v499
          %v505 = vunpack.c.h.b16 %v499
          %v506 = vpack.c.b16 %v502, %v502
          %v507 = vpack.c.b16 %v503, %v503
          %v508 = vpack.c.b16 %v504, %v504
          %v509 = vpack.c.b16 %v505, %v505
          %514 = vst [vmem:[%s240] sm:$0xf] %v506
          %515 = vst [vmem:[%s240 + $0x4] sm:$0xf] %v507
          %516 = vst [vmem:[%s240 + $0x8] sm:$0xf] %v508
          %517 = vst [vmem:[%s240 + $0xc] sm:$0xf] %v509
          %v518 = vmax.f32 %v468, 0.0
          %v519 = vmax.f32 %v471, 0.0
          %v520 = vmax.f32 %v474, 0.0
          %v521 = vmax.f32 %v477, 0.0
          %v522 = vpack.c.bf16 %v519, %v518
          %v523 = vpack.c.bf16 %v521, %v520
          %v526 = vunpack.c.l.b16 %v522
          %v527 = vunpack.c.h.b16 %v522
          %v528 = vunpack.c.l.b16 %v523
          %v529 = vunpack.c.h.b16 %v523
          %v530 = vpack.c.b16 %v526, %v526
          %v531 = vpack.c.b16 %v527, %v527
          %v532 = vpack.c.b16 %v528, %v528
          %v533 = vpack.c.b16 %v529, %v529
          %538 = vst [vmem:[%s247] sm:$0xf] %v530
          %539 = vst [vmem:[%s247 + $0x4] sm:$0xf] %v531
          %540 = vst [vmem:[%s247 + $0x8] sm:$0xf] %v532
          %541 = vst [vmem:[%s247 + $0xc] sm:$0xf] %v533
        $region36: #{tpu_custom_call.1} parent=27 // pred_fallthru
          _
        %s542 = sand.u32 %s96, 1
        %s543 = scalar_lea.sflag [#allocation4], %s542
        %s544 = sand.u32 %s96, 1
        %s545 = smul.addr %s544, 16
        %s546 = scalar_lea.vmem [#allocation3], %s545
        %s547 = sand.u32 %s22, 1
        %s548 = scalar_lea.sflag [#allocation6], %s547
        %s549 = sand.u32 %s122, 1
        %s550 = smul.addr %s549, 16
        %s551 = scalar_lea.vmem [#allocation5], %s550
        %s552 = sand.u32 %s22, 1
        %s553 = scalar_lea.sflag [#allocation6], %s552
        %s554 = sand.u32 %s148, 1
        %s555 = smul.addr %s554, 16
        %s556 = scalar_lea.vmem [#allocation7], %s555
        // Predicated region
        $region37: #{tpu_custom_call.1} parent=27 // pred_check
          %p557 = pneg %p106
        $region38: #{tpu_custom_call.1} parent=27 // pred_check_branch
          %559 = sbr.rel (%p557) target = $region40
        $region39: #{tpu_custom_call.1} parent=27 // pred_region
          %s560 = smul.u32 4, %s26
          %s562 = ssub.s32 256, 256
          %563 = vsyncadd %s543, %s562
          %s564 = smul.addr %s560, 64
          %s565 = scalar_lea.hbm %s2, %s564
          %s566 = sshll.u32 %s546, 4
          %s567 = int_to_ptr.vmem [resolvable:$true] %s566
          %572 = dma.vmem_to_hbm [thread:$0]  %s567, 256, %s565, %s543, 64, 64, 4
        $region40: #{tpu_custom_call.1} parent=27 // pred_fallthru
          _
        // Predicated region
        $region41: #{tpu_custom_call.1} parent=27 // pred_check
          %p573 = pneg %p132
        $region42: #{tpu_custom_call.1} parent=27 // pred_check_branch
          %575 = sbr.rel (%p573) target = $region44
        $region43: #{tpu_custom_call.1} parent=27 // pred_region
          %s576 = smul.u32 4, %s26
          %s578 = ssub.s32 256, 256
          %579 = vsyncadd %s548, %s578
          %s580 = smul.addr %s576, 64
          %s581 = scalar_lea.hbm %s3, %s580
          %s582 = sshll.u32 %s551, 4
          %s583 = int_to_ptr.vmem [resolvable:$true] %s582
          %588 = dma.vmem_to_hbm [thread:$0]  %s583, 256, %s581, %s548, 64, 64, 4
        $region44: #{tpu_custom_call.1} parent=27 // pred_fallthru
          _
        // Predicated region
        $region45: #{tpu_custom_call.1} parent=27 // pred_check
          %p589 = pneg %p158
        $region46: #{tpu_custom_call.1} parent=27 // pred_check_branch
          %591 = sbr.rel (%p589) target = $region48
        $region47: #{tpu_custom_call.1} parent=27 // pred_region
          %s592 = smul.u32 4, %s26
          %s594 = ssub.s32 256, 256
          %595 = vsyncadd %s553, %s594
          %s596 = smul.addr %s592, 64
          %s597 = scalar_lea.hbm %s4, %s596
          %s598 = sshll.u32 %s556, 4
          %s599 = int_to_ptr.vmem [resolvable:$true] %s598
          %604 = dma.vmem_to_hbm [thread:$0]  %s599, 256, %s597, %s553, 64, 64, 4
        $region48: #{tpu_custom_call.1} parent=27 // pred_fallthru
          _
      $region28: #{tpu_custom_call.1} parent=5 // pred_fallthru
        _
      %p605 = scmp.le.s32.totalorder 2, %s17
      // Predicated region
      $region49: #{tpu_custom_call.1} parent=5 // pred_check
        %p606 = pneg %p605
      $region50: #{tpu_custom_call.1} parent=5 // pred_check_branch
        %608 = sbr.rel (%p606) target = $region52
      $region51: #{tpu_custom_call.1} parent=5 // pred_region
        %s609 = ssub.s32 %s17, 2
        // Predicated region
        $region53: #{tpu_custom_call.1} parent=51 // pred_check
          %p610 = pneg %p112
        $region54: #{tpu_custom_call.1} parent=51 // pred_check_branch
          %612 = sbr.rel (%p610) target = $region56
        $region55: #{tpu_custom_call.1} parent=51 // pred_region
          %s613 = sand.u32 %s97, 1
          %s614 = scalar_lea.sflag [#allocation4], %s613
          %s615 = sand.u32 %s97, 1
          %s616 = smul.addr %s615, 16
          %s617 = scalar_lea.vmem [#allocation3], %s616
          %618 = dma.done %s614, 256
        $region56: #{tpu_custom_call.1} parent=51 // pred_fallthru
          _
        // Predicated region
        $region57: #{tpu_custom_call.1} parent=51 // pred_check
          %p619 = pneg %p138
        $region58: #{tpu_custom_call.1} parent=51 // pred_check_branch
          %621 = sbr.rel (%p619) target = $region60
        $region59: #{tpu_custom_call.1} parent=51 // pred_region
          %s622 = sand.u32 %s23, 1
          %s623 = scalar_lea.sflag [#allocation6], %s622
          %s624 = sand.u32 %s123, 1
          %s625 = smul.addr %s624, 16
          %s626 = scalar_lea.vmem [#allocation5], %s625
          %627 = dma.done %s623, 256
        $region60: #{tpu_custom_call.1} parent=51 // pred_fallthru
          _
        // Predicated region
        $region61: #{tpu_custom_call.1} parent=51 // pred_check
          %p628 = pneg %p164
        $region62: #{tpu_custom_call.1} parent=51 // pred_check_branch
          %630 = sbr.rel (%p628) target = $region64
        $region63: #{tpu_custom_call.1} parent=51 // pred_region
          %s631 = sand.u32 %s23, 1
          %s632 = scalar_lea.sflag [#allocation6], %s631
          %s633 = sand.u32 %s149, 1
          %s634 = smul.addr %s633, 16
          %s635 = scalar_lea.vmem [#allocation7], %s634
          %636 = dma.done %s632, 256
        $region64: #{tpu_custom_call.1} parent=51 // pred_fallthru
          _
      $region52: #{tpu_custom_call.1} parent=5 // pred_fallthru
        _
    $region6: #{tpu_custom_call.1} parent=1 // loop_footer
      %s21 = sadd.s32 1, %s17
    $region7: #{tpu_custom_call.1} parent=1 // loop_footer_branch
      %16 = sbr.rel target = $region3
    $region8: #{tpu_custom_call.1} parent=1 // loop_exit
      _
    %637 = vsyncpa [#allocation4], 1
    %s638 = scalar_lea.sflag [#allocation4], 1
    %639 = vsyncpa %s638, 1
    %640 = vsyncpa [#allocation6], 1
    %s641 = scalar_lea.sflag [#allocation6], 1
    %642 = vsyncpa %s641, 1

</llo_original>
